<compile_context>
chip_gen: v7x
topology: tpu7x:2x2x1
jax: 0.10.0
libtpu: 0.0.40
codegen_flags: <defaults>
</compile_context>

<pallas_src>
import jax
import jax.numpy as jnp
from jax.experimental import pallas as pl
from jax.experimental.pallas import tpu as pltpu

H = 128           # lane-dense padded hidden width
IN_DIM = 4        # real input features
C = 3             # real output classes
CP = 8            # padded class width (sublane-friendly, 16x less writeback than 128)
NEG_INF = -1e30   # mask value for padded class columns (finite: avoids inf-inf)


def mlp_kernel(x_ref, w1_ref, b1_ref, w2_ref, b2_ref, w3_ref, b3_ref, o_ref):
    """One (TB, 4) batch tile -> (TB, 8) log-softmax slab (cols 3..7 are garbage)."""
    x = x_ref[...]                                                          # (TB, 4) bf16

    h1 = jnp.dot(x, w1_ref[...], preferred_element_type=jnp.float32)       # (TB, 128) f32
    h1 = jnp.maximum(h1 + b1_ref[...], 0.0)

    h2 = jnp.dot(h1.astype(jnp.bfloat16), w2_ref[...],
                 preferred_element_type=jnp.float32)                        # (TB, 128) f32
    h2 = jnp.maximum(h2 + b2_ref[...], 0.0)

    logits = jnp.dot(h2.astype(jnp.bfloat16), w3_ref[...],
                     preferred_element_type=jnp.float32) + b3_ref[...]      # (TB, 8) f32
    # Padded class columns carry bias = -1e30 -> exp underflows to 0, so the
    # log_softmax over 8 lanes equals log_softmax over the real 3 classes.
    m = jnp.max(logits, axis=-1, keepdims=True)
    z = logits - m
    lse = jnp.log(jnp.sum(jnp.exp(z), axis=-1, keepdims=True))
    o_ref[...] = (z - lse).astype(o_ref.dtype)


def _round_up(n, m):
    return (n + m - 1) // m * m


def net_forward(x, params, tb=8192):
    """x: (B, 4) f32/bf16 -> (B, 3) f32 log-probs."""
    w1, b1, w2, b2, w3, b3 = params
    B = x.shape[0]
    TB = min(tb, _round_up(B, 8))            # batch tile, multiple of 8 sublanes
    if B > 8:
        # Ensure >=2 grid steps so the "parallel" axis can use both v7x TensorCores.
        TB = min(TB, _round_up(-(-B // 2), 8))
    TB = max(TB, 8)
    Bp = _round_up(B, TB)
    x = x.astype(jnp.bfloat16)               # stream activations in bf16 (halves HBM bytes)
    if Bp != B:
        x = jnp.pad(x, ((0, Bp - B), (0, 0)))

    out = pl.pallas_call(
        mlp_kernel,
        out_shape=jax.ShapeDtypeStruct((Bp, CP), jnp.float32),
        grid_spec=pl.GridSpec(
            grid=(Bp // TB,),
            in_specs=[
                pl.BlockSpec((TB, IN_DIM), lambda i: (i, 0)),   # x: streamed per tile
                pl.BlockSpec((IN_DIM, H), lambda i: (0, 0)),    # w1: VMEM-resident
                pl.BlockSpec((1, H), lambda i: (0, 0)),         # b1
                pl.BlockSpec((H, H), lambda i: (0, 0)),         # w2
                pl.BlockSpec((1, H), lambda i: (0, 0)),         # b2
                pl.BlockSpec((H, CP), lambda i: (0, 0)),        # w3 (8-wide padded classes)
                pl.BlockSpec((1, CP), lambda i: (0, 0)),        # b3
            ],
            out_specs=pl.BlockSpec((TB, CP), lambda i: (i, 0)),
        ),
        compiler_params=pltpu.CompilerParams(
            dimension_semantics=("parallel",),   # shard batch tiles across TCs (v7x)
        ),
    )(x, w1, b1, w2, b2, w3, b3)
    return out[:B, :C]


def init_params(key):
    """PyTorch-like Linear init, then pad host-side to lane-dense bf16 tiles."""
    def linear(key, fan_in, fan_out):
        kw, kb = jax.random.split(key)
        bound = 1.0 / (fan_in ** 0.5)
        w = jax.random.uniform(kw, (fan_in, fan_out), jnp.float32, -bound, bound)
        b = jax.random.uniform(kb, (fan_out,), jnp.float32, -bound, bound)
        return w, b

    k1, k2, k3 = jax.random.split(key, 3)
    w1, b1 = linear(k1, 4, 50)
    w2, b2 = linear(k2, 50, 50)
    w3, b3 = linear(k3, 50, 3)

    # Zero-padded weights: padded hidden units produce relu(0)=0 and contribute nothing.
    w1p = jnp.zeros((IN_DIM, H), jnp.float32).at[:, :50].set(w1).astype(jnp.bfloat16)
    b1p = jnp.zeros((1, H), jnp.float32).at[0, :50].set(b1)
    w2p = jnp.zeros((H, H), jnp.float32).at[:50, :50].set(w2).astype(jnp.bfloat16)
    b2p = jnp.zeros((1, H), jnp.float32).at[0, :50].set(b2)
    w3p = jnp.zeros((H, CP), jnp.float32).at[:50, :C].set(w3).astype(jnp.bfloat16)
    # Padded class columns get -1e30 bias so they vanish under log_softmax.
    b3p = jnp.full((1, CP), NEG_INF, jnp.float32).at[0, :C].set(b3)
    return w1p, b1p, w2p, b2p, w3p, b3p


def reference_forward(x, params):
    """Pure-JAX reference with the same bf16-in / f32-accumulate numerics as the kernel."""
    w1, b1, w2, b2, w3, b3 = params
    xb = x.astype(jnp.bfloat16)
    h1 = jnp.maximum(jnp.dot(xb, w1, preferred_element_type=jnp.float32) + b1, 0.0)
    h2 = jnp.maximum(jnp.dot(h1.astype(jnp.bfloat16), w2,
                             preferred_element_type=jnp.float32) + b2, 0.0)
    logits = jnp.dot(h2.astype(jnp.bfloat16), w3,
                     preferred_element_type=jnp.float32) + b3
    return jax.nn.log_softmax(logits, axis=-1)[:, :C]


if __name__ == "__main__":
    key = jax.random.PRNGKey(0)
    kp, kx = jax.random.split(key)
    params = init_params(kp)

    batch = 64
    x = jax.random.normal(kx, (batch, IN_DIM), dtype=jnp.float32)

    # Small tile (tb=16) so this small example exercises a multi-step grid (grid=(4,)).
    out = jax.block_until_ready(net_forward(x, params, tb=16))

    ref = reference_forward(x, params)
    assert out.shape == (batch, C)
    max_err = float(jnp.max(jnp.abs(out - ref)))
    assert jnp.allclose(out, ref, atol=1e-4, rtol=1e-4), f"max_err={max_err}"

    print("KERNEL_OK")
</pallas_src>

<mosaic_0001>
module attributes {stable_mosaic.version = 11 : i64} {
  func.func @mlp_kernel(%arg0: i32, %arg1: memref<16x4xbf16, #tpu.memory_space<vmem>>, %arg2: memref<4x128xbf16, #tpu.memory_space<vmem>>, %arg3: memref<1x128xf32, #tpu.memory_space<vmem>>, %arg4: memref<128x128xbf16, #tpu.memory_space<vmem>>, %arg5: memref<1x128xf32, #tpu.memory_space<vmem>>, %arg6: memref<128x8xbf16, #tpu.memory_space<vmem>>, %arg7: memref<1x8xf32, #tpu.memory_space<vmem>>, %arg8: memref<16x8xf32, #tpu.memory_space<vmem>>) attributes {dimension_semantics = [#tpu.dimension_semantics<parallel>], iteration_bounds = array<i64: 4>, scalar_prefetch = 0 : i64, scratch_operands = 0 : i64, tpu.core_type = #tpu.core_type<tc>, window_params = [{transform_indices = @transform_0, window_bounds = array<i64: 16, 4>}, {pipeline_mode = #tpu.pipeline_mode<synchronous>, transform_indices = @transform_1, window_bounds = array<i64: 4, 128>}, {pipeline_mode = #tpu.pipeline_mode<synchronous>, transform_indices = @transform_2, window_bounds = array<i64: 1, 128>}, {pipeline_mode = #tpu.pipeline_mode<synchronous>, transform_indices = @transform_3, window_bounds = array<i64: 128, 128>}, {pipeline_mode = #tpu.pipeline_mode<synchronous>, transform_indices = @transform_4, window_bounds = array<i64: 1, 128>}, {pipeline_mode = #tpu.pipeline_mode<synchronous>, transform_indices = @transform_5, window_bounds = array<i64: 128, 8>}, {pipeline_mode = #tpu.pipeline_mode<synchronous>, transform_indices = @transform_6, window_bounds = array<i64: 1, 8>}, {transform_indices = @transform_7, window_bounds = array<i64: 16, 8>}]} {
    %c0 = arith.constant 0 : index
    %c0_0 = arith.constant 0 : index
    %0 = vector.load %arg1[%c0, %c0_0] : memref<16x4xbf16, #tpu.memory_space<vmem>>, vector<16x4xbf16>
    %c0_1 = arith.constant 0 : index
    %c0_2 = arith.constant 0 : index
    %1 = vector.load %arg2[%c0_1, %c0_2] : memref<4x128xbf16, #tpu.memory_space<vmem>>, vector<4x128xbf16>
    %cst = arith.constant dense<0.000000e+00> : vector<16x128xf32>
    %2 = tpu.matmul %0, %1, %cst {dimension_numbers = #tpu.dot_dimension_numbers<[1], [0], [0], [1], [0, 0, 1, 1], [], []>} : vector<16x4xbf16>, vector<4x128xbf16>, vector<16x128xf32> -> vector<16x128xf32>
    %c0_3 = arith.constant 0 : index
    %c0_4 = arith.constant 0 : index
    %3 = vector.load %arg3[%c0_3, %c0_4] : memref<1x128xf32, #tpu.memory_space<vmem>>, vector<1x128xf32>
    %4 = vector.broadcast %3 : vector<1x128xf32> to vector<16x128xf32>
    %5 = arith.addf %2, %4 : vector<16x128xf32>
    %cst_5 = arith.constant 0.000000e+00 : f32
    %6 = vector.broadcast %cst_5 : f32 to vector<16x128xf32>
    %7 = arith.maximumf %5, %6 : vector<16x128xf32>
    %8 = arith.truncf %7 : vector<16x128xf32> to vector<16x128xbf16>
    %c0_6 = arith.constant 0 : index
    %c0_7 = arith.constant 0 : index
    %9 = vector.load %arg4[%c0_6, %c0_7] : memref<128x128xbf16, #tpu.memory_space<vmem>>, vector<128x128xbf16>
    %cst_8 = arith.constant dense<0.000000e+00> : vector<16x128xf32>
    %10 = tpu.matmul %8, %9, %cst_8 {dimension_numbers = #tpu.dot_dimension_numbers<[1], [0], [0], [1], [0, 0, 1, 1], [], []>} : vector<16x128xbf16>, vector<128x128xbf16>, vector<16x128xf32> -> vector<16x128xf32>
    %c0_9 = arith.constant 0 : index
    %c0_10 = arith.constant 0 : index
    %11 = vector.load %arg5[%c0_9, %c0_10] : memref<1x128xf32, #tpu.memory_space<vmem>>, vector<1x128xf32>
    %12 = vector.broadcast %11 : vector<1x128xf32> to vector<16x128xf32>
    %13 = arith.addf %10, %12 : vector<16x128xf32>
    %cst_11 = arith.constant 0.000000e+00 : f32
    %14 = vector.broadcast %cst_11 : f32 to vector<16x128xf32>
    %15 = arith.maximumf %13, %14 : vector<16x128xf32>
    %16 = arith.truncf %15 : vector<16x128xf32> to vector<16x128xbf16>
    %c0_12 = arith.constant 0 : index
    %c0_13 = arith.constant 0 : index
    %17 = vector.load %arg6[%c0_12, %c0_13] : memref<128x8xbf16, #tpu.memory_space<vmem>>, vector<128x8xbf16>
    %cst_14 = arith.constant dense<0.000000e+00> : vector<16x8xf32>
    %18 = tpu.matmul %16, %17, %cst_14 {dimension_numbers = #tpu.dot_dimension_numbers<[1], [0], [0], [1], [0, 0, 1, 1], [], []>} : vector<16x128xbf16>, vector<128x8xbf16>, vector<16x8xf32> -> vector<16x8xf32>
    %c0_15 = arith.constant 0 : index
    %c0_16 = arith.constant 0 : index
    %19 = vector.load %arg7[%c0_15, %c0_16] : memref<1x8xf32, #tpu.memory_space<vmem>>, vector<1x8xf32>
    %20 = vector.broadcast %19 : vector<1x8xf32> to vector<16x8xf32>
    %21 = arith.addf %18, %20 : vector<16x8xf32>
    %cst_17 = arith.constant dense<0xFF800000> : vector<16xf32>
    %22 = vector.multi_reduction <maximumf>, %21, %cst_17 [1] : vector<16x8xf32> to vector<16xf32>
    %23 = vector.shape_cast %22 : vector<16xf32> to vector<16x1xf32>
    %24 = vector.broadcast %23 : vector<16x1xf32> to vector<16x8xf32>
    %25 = arith.subf %21, %24 : vector<16x8xf32>
    %26 = math.exp %25 : vector<16x8xf32>
    %cst_18 = arith.constant dense<0.000000e+00> : vector<16xf32>
    %27 = vector.multi_reduction <add>, %26, %cst_18 [1] : vector<16x8xf32> to vector<16xf32>
    %28 = vector.shape_cast %27 : vector<16xf32> to vector<16x1xf32>
    %29 = math.log %28 : vector<16x1xf32>
    %30 = vector.broadcast %29 : vector<16x1xf32> to vector<16x8xf32>
    %31 = arith.subf %25, %30 : vector<16x8xf32>
    %c0_19 = arith.constant 0 : index
    %c0_20 = arith.constant 0 : index
    %32 = vector.load %arg8[%c0_19, %c0_20] : memref<16x8xf32, #tpu.memory_space<vmem>>, vector<16x8xf32>
    tpu.vector_store %arg8[%c0_19, %c0_20], %31 {strides = array<i32>} : memref<16x8xf32, #tpu.memory_space<vmem>>, vector<16x8xf32>,
    return
  }
  func.func @transform_0(%arg0: i32) -> (i32, i32) {
    %c0_i32 = arith.constant 0 : i32
    %c0_i32_0 = arith.constant 0 : i32
    return %arg0, %c0_i32 : i32, i32
  }
  func.func @transform_1(%arg0: i32) -> (i32, i32) {
    %c0_i32 = arith.constant 0 : i32
    %c0_i32_0 = arith.constant 0 : i32
    %c0_i32_1 = arith.constant 0 : i32
    return %c0_i32, %c0_i32_0 : i32, i32
  }
  func.func @transform_2(%arg0: i32) -> (i32, i32) {
    %c0_i32 = arith.constant 0 : i32
    %c0_i32_0 = arith.constant 0 : i32
    %c0_i32_1 = arith.constant 0 : i32
    return %c0_i32, %c0_i32_0 : i32, i32
  }
  func.func @transform_3(%arg0: i32) -> (i32, i32) {
    %c0_i32 = arith.constant 0 : i32
    %c0_i32_0 = arith.constant 0 : i32
    %c0_i32_1 = arith.constant 0 : i32
    return %c0_i32, %c0_i32_0 : i32, i32
  }
  func.func @transform_4(%arg0: i32) -> (i32, i32) {
    %c0_i32 = arith.constant 0 : i32
    %c0_i32_0 = arith.constant 0 : i32
    %c0_i32_1 = arith.constant 0 : i32
    return %c0_i32, %c0_i32_0 : i32, i32
  }
  func.func @transform_5(%arg0: i32) -> (i32, i32) {
    %c0_i32 = arith.constant 0 : i32
    %c0_i32_0 = arith.constant 0 : i32
    %c0_i32_1 = arith.constant 0 : i32
    return %c0_i32, %c0_i32_0 : i32, i32
  }
  func.func @transform_6(%arg0: i32) -> (i32, i32) {
    %c0_i32 = arith.constant 0 : i32
    %c0_i32_0 = arith.constant 0 : i32
    %c0_i32_1 = arith.constant 0 : i32
    return %c0_i32, %c0_i32_0 : i32, i32
  }
  func.func @transform_7(%arg0: i32) -> (i32, i32) {
    %c0_i32 = arith.constant 0 : i32
    %c0_i32_0 = arith.constant 0 : i32
    return %arg0, %c0_i32 : i32, i32
  }
}

</mosaic_0001>

<llo_original>
// kernel: tpu_custom_call.1
$region0: #{tpu_custom_call.1}
  #allocation0 [shape = 'u32[]', space=smem, size = 0x4, offset = 0x4, fixed_abs, tag = 'smem constant byte address 0x4 - core index']
  #allocation1 [shape = 'u32[144,128]{1,0:T(1,128)}', space=vmem, size = 0x12000, scoped, tag = 'internal scratch']
  %s0 = inlined_call_operand.vmem [shape: bf16[64,4], index: 0, kind: input, shape index: {}]
  %s1 = inlined_call_operand.vmem [shape: bf16[4,128], index: 1, kind: input, shape index: {}]
  %s2 = inlined_call_operand.vmem [shape: f32[1,128], index: 2, kind: input, shape index: {}]
  %s3 = inlined_call_operand.vmem [shape: bf16[128,128], index: 3, kind: input, shape index: {}]
  %s4 = inlined_call_operand.vmem [shape: f32[1,128], index: 4, kind: input, shape index: {}]
  %s5 = inlined_call_operand.vmem [shape: bf16[128,8], index: 5, kind: input, shape index: {}]
  %s6 = inlined_call_operand.vmem [shape: f32[1,8], index: 6, kind: input, shape index: {}]
  %s7 = inlined_call_operand.vmem [shape: f32[64,8], index: 7, kind: output, shape index: {}]
  %s8 = sld [smem:[#allocation0]]
  $region61: #{tpu_custom_call.1} parent=0
    _
  %s10 = ssub.s32 1, %s8
  %s11 = scalar_select 0, %s10, %s8
  loop: start=0, step=1, limit=6
  $region2: #{tpu_custom_call.1} parent=0 // loop_pre_header
    _
  $region3: #{tpu_custom_call.1} parent=0 // loop_header
    %s13 = sphi 0, %s17
    %p14 = scmp.ge.s32.totalorder %s13, 6
    %s23 = sphi 0, %s25
    %s26 = sphi 0, %s23
    %s27 = sphi 0, %s26
    %s43 = sphi 0, %s27
    %s47 = sphi 0, %s47
    %s49 = sphi 0, %s47
    %s50 = sphi 0, %s49
    %s64 = sphi 0, %s50
    %s68 = sphi 0, %s68
    %s70 = sphi 0, %s68
    %s71 = sphi 0, %s70
    %s85 = sphi 0, %s71
    %s89 = sphi 0, %s89
    %s91 = sphi 0, %s89
    %s92 = sphi 0, %s91
    %s106 = sphi 0, %s92
    %s110 = sphi 0, %s110
    %s112 = sphi 0, %s110
    %s113 = sphi 0, %s112
    %s127 = sphi 0, %s113
    %s131 = sphi 0, %s131
    %s133 = sphi 0, %s131
    %s134 = sphi 0, %s133
    %s148 = sphi 0, %s134
    %s152 = sphi 0, %s152
    %s154 = sphi 0, %s152
    %s155 = sphi 0, %s154
    %s169 = sphi 0, %s155
    %s175 = sphi 0, %s177
    %s178 = sphi 0, %s175
    %s179 = sphi 0, %s178
    %s195 = sphi 0, %s179
  $region4: #{tpu_custom_call.1} parent=0 // loop_header_branch
    %16 = sbr.rel (%p14) target = $region8
  $region5: #{tpu_custom_call.1} parent=0 // loop_body
    %s18 = ssub.s32 %s13, 1
    %s19 = ssub.s32 %s13, 2
    %s20 = sadd.s32 %s13, 1
    %s21 = ssub.s32 %s13, %s20
    %p22 = scmp.eq.s32.totalorder %s21, 0
    %s24 = sadd.s32 %s23, 1
    %s25 = scalar_select %p22, %s23, %s24
    %p28 = pneg %p22
    %p29 = scmp.eq.s32.totalorder %s13, 3
    %p30 = por %p28, %p29
    %p31 = scmp.ne.s32.totalorder %s23, %s26
    %p32 = scmp.eq.s32.totalorder %s13, 0
    %p33 = por %p31, %p32
    %p34 = scmp.ne.s32.totalorder %s23, %s26
    %p35 = scmp.eq.s32.totalorder %s18, 3
    %p36 = por %p34, %p35
    %p37 = scmp.ne.s32.totalorder %s26, %s27
    %p38 = scmp.eq.s32.totalorder %s18, 0
    %p39 = por %p37, %p38
    %p40 = scmp.ne.s32.totalorder %s26, %s27
    %p41 = scmp.eq.s32.totalorder %s19, 3
    %p42 = por %p40, %p41
    %p44 = scmp.ne.s32.totalorder %s27, %s43
    %p45 = scmp.eq.s32.totalorder %s19, 0
    %p46 = por %p44, %p45
    %s48 = sadd.s32 %s47, 1
    %p51 = scmp.eq.s32.totalorder %s13, 3
    %p52 = scmp.ne.s32.totalorder %s47, %s49
    %p53 = scmp.eq.s32.totalorder %s13, 0
    %p54 = por %p52, %p53
    %p55 = scmp.ne.s32.totalorder %s47, %s49
    %p56 = scmp.eq.s32.totalorder %s18, 3
    %p57 = por %p55, %p56
    %p58 = scmp.ne.s32.totalorder %s49, %s50
    %p59 = scmp.eq.s32.totalorder %s18, 0
    %p60 = por %p58, %p59
    %p61 = scmp.ne.s32.totalorder %s49, %s50
    %p62 = scmp.eq.s32.totalorder %s19, 3
    %p63 = por %p61, %p62
    %p65 = scmp.ne.s32.totalorder %s50, %s64
    %p66 = scmp.eq.s32.totalorder %s19, 0
    %p67 = por %p65, %p66
    %s69 = sadd.s32 %s68, 1
    %p72 = scmp.eq.s32.totalorder %s13, 3
    %p73 = scmp.ne.s32.totalorder %s68, %s70
    %p74 = scmp.eq.s32.totalorder %s13, 0
    %p75 = por %p73, %p74
    %p76 = scmp.ne.s32.totalorder %s68, %s70
    %p77 = scmp.eq.s32.totalorder %s18, 3
    %p78 = por %p76, %p77
    %p79 = scmp.ne.s32.totalorder %s70, %s71
    %p80 = scmp.eq.s32.totalorder %s18, 0
    %p81 = por %p79, %p80
    %p82 = scmp.ne.s32.totalorder %s70, %s71
    %p83 = scmp.eq.s32.totalorder %s19, 3
    %p84 = por %p82, %p83
    %p86 = scmp.ne.s32.totalorder %s71, %s85
    %p87 = scmp.eq.s32.totalorder %s19, 0
    %p88 = por %p86, %p87
    %s90 = sadd.s32 %s89, 1
    %p93 = scmp.eq.s32.totalorder %s13, 3
    %p94 = scmp.ne.s32.totalorder %s89, %s91
    %p95 = scmp.eq.s32.totalorder %s13, 0
    %p96 = por %p94, %p95
    %p97 = scmp.ne.s32.totalorder %s89, %s91
    %p98 = scmp.eq.s32.totalorder %s18, 3
    %p99 = por %p97, %p98
    %p100 = scmp.ne.s32.totalorder %s91, %s92
    %p101 = scmp.eq.s32.totalorder %s18, 0
    %p102 = por %p100, %p101
    %p103 = scmp.ne.s32.totalorder %s91, %s92
    %p104 = scmp.eq.s32.totalorder %s19, 3
    %p105 = por %p103, %p104
    %p107 = scmp.ne.s32.totalorder %s92, %s106
    %p108 = scmp.eq.s32.totalorder %s19, 0
    %p109 = por %p107, %p108
    %s111 = sadd.s32 %s110, 1
    %p114 = scmp.eq.s32.totalorder %s13, 3
    %p115 = scmp.ne.s32.totalorder %s110, %s112
    %p116 = scmp.eq.s32.totalorder %s13, 0
    %p117 = por %p115, %p116
    %p118 = scmp.ne.s32.totalorder %s110, %s112
    %p119 = scmp.eq.s32.totalorder %s18, 3
    %p120 = por %p118, %p119
    %p121 = scmp.ne.s32.totalorder %s112, %s113
    %p122 = scmp.eq.s32.totalorder %s18, 0
    %p123 = por %p121, %p122
    %p124 = scmp.ne.s32.totalorder %s112, %s113
    %p125 = scmp.eq.s32.totalorder %s19, 3
    %p126 = por %p124, %p125
    %p128 = scmp.ne.s32.totalorder %s113, %s127
    %p129 = scmp.eq.s32.totalorder %s19, 0
    %p130 = por %p128, %p129
    %s132 = sadd.s32 %s131, 1
    %p135 = scmp.eq.s32.totalorder %s13, 3
    %p136 = scmp.ne.s32.totalorder %s131, %s133
    %p137 = scmp.eq.s32.totalorder %s13, 0
    %p138 = por %p136, %p137
    %p139 = scmp.ne.s32.totalorder %s131, %s133
    %p140 = scmp.eq.s32.totalorder %s18, 3
    %p141 = por %p139, %p140
    %p142 = scmp.ne.s32.totalorder %s133, %s134
    %p143 = scmp.eq.s32.totalorder %s18, 0
    %p144 = por %p142, %p143
    %p145 = scmp.ne.s32.totalorder %s133, %s134
    %p146 = scmp.eq.s32.totalorder %s19, 3
    %p147 = por %p145, %p146
    %p149 = scmp.ne.s32.totalorder %s134, %s148
    %p150 = scmp.eq.s32.totalorder %s19, 0
    %p151 = por %p149, %p150
    %s153 = sadd.s32 %s152, 1
    %p156 = scmp.eq.s32.totalorder %s13, 3
    %p157 = scmp.ne.s32.totalorder %s152, %s154
    %p158 = scmp.eq.s32.totalorder %s13, 0
    %p159 = por %p157, %p158
    %p160 = scmp.ne.s32.totalorder %s152, %s154
    %p161 = scmp.eq.s32.totalorder %s18, 3
    %p162 = por %p160, %p161
    %p163 = scmp.ne.s32.totalorder %s154, %s155
    %p164 = scmp.eq.s32.totalorder %s18, 0
    %p165 = por %p163, %p164
    %p166 = scmp.ne.s32.totalorder %s154, %s155
    %p167 = scmp.eq.s32.totalorder %s19, 3
    %p168 = por %p166, %p167
    %p170 = scmp.ne.s32.totalorder %s155, %s169
    %p171 = scmp.eq.s32.totalorder %s19, 0
    %p172 = por %p170, %p171
    %s173 = ssub.s32 %s13, %s20
    %p174 = scmp.eq.s32.totalorder %s173, 0
    %s176 = sadd.s32 %s175, 1
    %s177 = scalar_select %p174, %s175, %s176
    %p180 = pneg %p174
    %p181 = scmp.eq.s32.totalorder %s13, 3
    %p182 = por %p180, %p181
    %p183 = scmp.ne.s32.totalorder %s175, %s178
    %p184 = scmp.eq.s32.totalorder %s13, 0
    %p185 = por %p183, %p184
    %p186 = scmp.ne.s32.totalorder %s175, %s178
    %p187 = scmp.eq.s32.totalorder %s18, 3
    %p188 = por %p186, %p187
    %p189 = scmp.ne.s32.totalorder %s178, %s179
    %p190 = scmp.eq.s32.totalorder %s18, 0
    %p191 = por %p189, %p190
    %p192 = scmp.ne.s32.totalorder %s178, %s179
    %p193 = scmp.eq.s32.totalorder %s19, 3
    %p194 = por %p192, %p193
    %p196 = scmp.ne.s32.totalorder %s179, %s195
    %p197 = scmp.eq.s32.totalorder %s19, 0
    %p198 = por %p196, %p197
    %p199 = scmp.le.s32.totalorder 1, %s13
    %p200 = scmp.lt.s32.totalorder %s13, 5
    %p201 = pnand %p199, %p200
    %p202 = pneg %p201
    // Predicated region
    $region9: #{tpu_custom_call.1} parent=5 // pred_check
      _
    $region10: #{tpu_custom_call.1} parent=5 // pred_check_branch
      %204 = sbr.rel (%p201) target = $region12
    $region11: #{tpu_custom_call.1} parent=5 // pred_region
      %s205 = ssub.s32 %s13, 1
      // Predicated region
      $region13: #{tpu_custom_call.1} parent=11 // pred_check
        %p206 = pneg %p60
      $region14: #{tpu_custom_call.1} parent=11 // pred_check_branch
        %208 = sbr.rel (%p206) target = $region16
      $region15: #{tpu_custom_call.1} parent=11 // pred_region
        _
      $region16: #{tpu_custom_call.1} parent=11 // pred_fallthru
        _
      // Predicated region
      $region17: #{tpu_custom_call.1} parent=11 // pred_check
        %p209 = pneg %p81
      $region18: #{tpu_custom_call.1} parent=11 // pred_check_branch
        %211 = sbr.rel (%p209) target = $region20
      $region19: #{tpu_custom_call.1} parent=11 // pred_region
        _
      $region20: #{tpu_custom_call.1} parent=11 // pred_fallthru
        _
      // Predicated region
      $region21: #{tpu_custom_call.1} parent=11 // pred_check
        %p212 = pneg %p102
      $region22: #{tpu_custom_call.1} parent=11 // pred_check_branch
        %214 = sbr.rel (%p212) target = $region24
      $region23: #{tpu_custom_call.1} parent=11 // pred_region
        _
      $region24: #{tpu_custom_call.1} parent=11 // pred_fallthru
        _
      // Predicated region
      $region25: #{tpu_custom_call.1} parent=11 // pred_check
        %p215 = pneg %p123
      $region26: #{tpu_custom_call.1} parent=11 // pred_check_branch
        %217 = sbr.rel (%p215) target = $region28
      $region27: #{tpu_custom_call.1} parent=11 // pred_region
        _
      $region28: #{tpu_custom_call.1} parent=11 // pred_fallthru
        _
      // Predicated region
      $region29: #{tpu_custom_call.1} parent=11 // pred_check
        %p218 = pneg %p144
      $region30: #{tpu_custom_call.1} parent=11 // pred_check_branch
        %220 = sbr.rel (%p218) target = $region32
      $region31: #{tpu_custom_call.1} parent=11 // pred_region
        _
      $region32: #{tpu_custom_call.1} parent=11 // pred_fallthru
        _
      // Predicated region
      $region33: #{tpu_custom_call.1} parent=11 // pred_check
        %p221 = pneg %p165
      $region34: #{tpu_custom_call.1} parent=11 // pred_check_branch
        %223 = sbr.rel (%p221) target = $region36
      $region35: #{tpu_custom_call.1} parent=11 // pred_region
        _
      $region36: #{tpu_custom_call.1} parent=11 // pred_fallthru
        _
    $region12: #{tpu_custom_call.1} parent=5 // pred_fallthru
      _
    %p224 = scmp.lt.s32.totalorder %s13, 4
    // Predicated region
    $region37: #{tpu_custom_call.1} parent=5 // pred_check
      %p225 = pneg %p224
    $region38: #{tpu_custom_call.1} parent=5 // pred_check_branch
      %227 = sbr.rel (%p225) target = $region40
    $region39: #{tpu_custom_call.1} parent=5 // pred_region
      // Predicated region
      $region41: #{tpu_custom_call.1} parent=39 // pred_check
        %p228 = pneg %p33
      $region42: #{tpu_custom_call.1} parent=39 // pred_check_branch
        %230 = sbr.rel (%p228) target = $region44
      $region43: #{tpu_custom_call.1} parent=39 // pred_region
        %s231 = smul.u32 2, %s13
        %p232 = scmp.lt.s32.totalorder %s231, 7
        %s233 = scalar_select %p232, %s231, 7
        %s234 = smul.addr %s233, 4
        %s235 = scalar_lea.vmem %s0, %s234
        %s236 = smul.u32 2, %s13
      $region44: #{tpu_custom_call.1} parent=39 // pred_fallthru
        _
    $region40: #{tpu_custom_call.1} parent=5 // pred_fallthru
      _
    %p237 = scmp.le.s32.totalorder 1, %s13
    %p238 = scmp.lt.s32.totalorder %s13, 5
    %p239 = pnand %p237, %p238
    %p240 = pneg %p239
    // Predicated region
    $region45: #{tpu_custom_call.1} parent=5 // pred_check
      _
    $region46: #{tpu_custom_call.1} parent=5 // pred_check_branch
      %242 = sbr.rel (%p239) target = $region48
    $region47: #{tpu_custom_call.1} parent=5 // pred_region
      %s243 = ssub.s32 %s13, 1
      %s244 = smul.u32 2, %s18
      %p245 = scmp.lt.s32.totalorder %s244, 7
      %s246 = scalar_select %p245, %s244, 7
      %s247 = smul.addr %s246, 4
      %s248 = scalar_lea.vmem %s0, %s247
      %p249 = pneg %p39
      %p250 = pneg %p36
      %p251 = pneg %p60
      %p252 = pneg %p57
      %p253 = pneg %p81
      %p254 = pneg %p78
      %p255 = pneg %p102
      %p256 = pneg %p99
      %p257 = pneg %p123
      %p258 = pneg %p120
      %p259 = pneg %p144
      %p260 = pneg %p141
      %p261 = pneg %p165
      %p262 = pneg %p162
      %p263 = pneg %p191
      %p264 = pneg %p188
      %s265 = smul.u32 2, %s18
      %p266 = scmp.lt.s32.totalorder %s265, 7
      %s267 = scalar_select %p266, %s265, 7
      %s268 = smul.addr %s267, 8
      %s269 = scalar_lea.vmem %s7, %s268
      %s270 = smul.u32 2, %s18
      %p271 = scmp.lt.s32.totalorder %s270, 7
      %s272 = scalar_select %p271, %s270, 7
      %s273 = smul.addr %s272, 4
      %s274 = scalar_lea.vmem %s0, %s273
      %s275 = smul.u32 2, %s18
      %s276 = smul.u32 2, %s18
      %p277 = scmp.lt.s32.totalorder %s276, 7
      %s278 = scalar_select %p277, %s276, 7
      %s279 = smul.addr %s278, 8
      %s280 = scalar_lea.vmem %s7, %s279
      %s281 = smul.u32 2, %s18
      %v283 = vld [vmem:[%s274] sm:$0xf]
      %v284 = vld [vmem:[%s274 + $0x4] sm:$0xf]
      %v285 = vld [vmem:[%s1] sm:$0x3]
      %v286 = vld [vmem:[%s2] sm:$0x1]
      %v288 = vlaneseq
      %v289 = vshrl.u32 %v288, 7
      %v290 = vsub.s32 0, %v289
      %v291 = vrot.slane %v286, %v290
      %v295 = vunpack.c.l.b16 %v283
      %v296 = vunpack.c.l.b16 %v284
      %v297 = vpack.c.b16 %v296, %v295
      %vm298 = vcmask 31744
      %v300 = vsel %vm298, %v297, 0
      %vm302 = vcmask 1041408
      %v304 = vsel %vm302, %v285, 0
      %306 = vmatprep.subr.bf16.mxu0 0
      %307 = vmatpush1.bf16.msra.mxu0 %v304
      %308 = vmatprep.subr.bf16.mxu0 0
      %309 = vmatpush1.bf16.msra.mxu0 0
      %310 = vmatprep.subr.bf16.mxu0 0
      %311 = vmatpush1.bf16.msra.mxu0 0
      %312 = vmatprep.subr.bf16.mxu0 0
      %313 = vmatpush1.bf16.msra.mxu0 0
      %314 = vmatprep.subr.bf16.mxu0 0
      %315 = vmatpush1.bf16.msra.mxu0 0
      %316 = vmatprep.subr.bf16.mxu0 0
      %317 = vmatpush1.bf16.msra.mxu0 0
      %318 = vmatprep.subr.bf16.mxu0 0
      %319 = vmatpush1.bf16.msra.mxu0 0
      %320 = vmatprep.subr.bf16.mxu0 0
      %321 = vmatpush1.bf16.msra.mxu0 0
      %322 = vmatprep.subr.bf16.mxu0 0
      %323 = vmatpush1.bf16.msra.mxu0 0
      %324 = vmatprep.subr.bf16.mxu0 0
      %325 = vmatpush1.bf16.msra.mxu0 0
      %326 = vmatprep.subr.bf16.mxu0 0
      %327 = vmatpush1.bf16.msra.mxu0 0
      %328 = vmatprep.subr.bf16.mxu0 0
      %329 = vmatpush1.bf16.msra.mxu0 0
      %330 = vmatprep.subr.bf16.mxu0 0
      %331 = vmatpush1.bf16.msra.mxu0 0
      %332 = vmatprep.subr.bf16.mxu0 0
      %333 = vmatpush1.bf16.msra.mxu0 0
      %334 = vmatprep.subr.bf16.mxu0 0
      %335 = vmatpush1.bf16.msra.mxu0 0
      %336 = vmatprep.subr.bf16.mxu0 0
      %337 = vmatpush1.bf16.msra.mxu0 0
      %338 = vmatprep.mubr.bf16.mxu0 0
      %339 = vmatmul.mubr.bf16.gmra.mrb[0].mxu0 %v300
      %v340 = vpop.f32.mrb[0].mxu0
      %v341 = vadd.f32 %v291, %v340
      %v342 = vpop.f32.mrb[0].mxu0
      %v343 = vpop.f32.mrb[0].mxu0
      %v344 = vadd.f32 %v291, %v343
      %v345 = vpop.f32.mrb[0].mxu0
      %346 = vdwg.mxu0
      %v347 = vmax.f32 %v341, 0.0
      %v348 = vmax.f32 %v344, 0.0
      %v349 = vpack.c.bf16 %v348, %v347
      %v350 = vld [vmem:[%s3] sm:$0xf]
      %v351 = vld [vmem:[%s3 + $0x4] sm:$0xf]
      %v352 = vld [vmem:[%s3 + $0x8] sm:$0xf]
      %v353 = vld [vmem:[%s3 + $0xc] sm:$0xf]
      %v354 = vld [vmem:[%s3 + $0x10] sm:$0xf]
      %v355 = vld [vmem:[%s3 + $0x14] sm:$0xf]
      %v356 = vld [vmem:[%s3 + $0x18] sm:$0xf]
      %v357 = vld [vmem:[%s3 + $0x1c] sm:$0xf]
      %v358 = vld [vmem:[%s3 + $0x20] sm:$0xf]
      %v359 = vld [vmem:[%s3 + $0x24] sm:$0xf]
      %v360 = vld [vmem:[%s3 + $0x28] sm:$0xf]
      %v361 = vld [vmem:[%s3 + $0x2c] sm:$0xf]
      %v362 = vld [vmem:[%s3 + $0x30] sm:$0xf]
      %v363 = vld [vmem:[%s3 + $0x34] sm:$0xf]
      %v364 = vld [vmem:[%s3 + $0x38] sm:$0xf]
      %v365 = vld [vmem:[%s3 + $0x3c] sm:$0xf]
      %v366 = vld [vmem:[%s4] sm:$0x1]
      %v368 = vlaneseq
      %v369 = vshrl.u32 %v368, 7
      %v370 = vsub.s32 0, %v369
      %v371 = vrot.slane %v366, %v370
      %v389 = vunpack.c.l.b16 %v350
      %v390 = vunpack.c.l.b16 %v351
      %v391 = vunpack.c.l.b16 %v352
      %v392 = vunpack.c.l.b16 %v353
      %v393 = vunpack.c.l.b16 %v354
      %v394 = vunpack.c.l.b16 %v355
      %v395 = vunpack.c.l.b16 %v356
      %v396 = vunpack.c.l.b16 %v357
      %v397 = vunpack.c.l.b16 %v358
      %v398 = vunpack.c.l.b16 %v359
      %v399 = vunpack.c.l.b16 %v360
      %v400 = vunpack.c.l.b16 %v361
      %v401 = vunpack.c.l.b16 %v362
      %v402 = vunpack.c.l.b16 %v363
      %v403 = vunpack.c.l.b16 %v364
      %v404 = vunpack.c.l.b16 %v365
      %v405 = vpack.c.b16 %v390, %v389
      %v406 = vpack.c.b16 %v392, %v391
      %v407 = vpack.c.b16 %v394, %v393
      %v408 = vpack.c.b16 %v396, %v395
      %v409 = vpack.c.b16 %v398, %v397
      %v410 = vpack.c.b16 %v400, %v399
      %v411 = vpack.c.b16 %v402, %v401
      %v412 = vpack.c.b16 %v404, %v403
      %421 = vmatprep.subr.bf16.mxu0 0
      %422 = vmatpush1.bf16.msra.mxu0 %v405
      %423 = vmatprep.subr.bf16.mxu0 0
      %424 = vmatpush1.bf16.msra.mxu0 %v406
      %425 = vmatprep.subr.bf16.mxu0 0
      %426 = vmatpush1.bf16.msra.mxu0 %v407
      %427 = vmatprep.subr.bf16.mxu0 0
      %428 = vmatpush1.bf16.msra.mxu0 %v408
      %429 = vmatprep.subr.bf16.mxu0 0
      %430 = vmatpush1.bf16.msra.mxu0 %v409
      %431 = vmatprep.subr.bf16.mxu0 0
      %432 = vmatpush1.bf16.msra.mxu0 %v410
      %433 = vmatprep.subr.bf16.mxu0 0
      %434 = vmatpush1.bf16.msra.mxu0 %v411
      %435 = vmatprep.subr.bf16.mxu0 0
      %436 = vmatpush1.bf16.msra.mxu0 %v412
      %437 = vmatprep.subr.bf16.mxu0 0
      %438 = vmatpush1.bf16.msra.mxu0 0
      %439 = vmatprep.subr.bf16.mxu0 0
      %440 = vmatpush1.bf16.msra.mxu0 0
      %441 = vmatprep.subr.bf16.mxu0 0
      %442 = vmatpush1.bf16.msra.mxu0 0
      %443 = vmatprep.subr.bf16.mxu0 0
      %444 = vmatpush1.bf16.msra.mxu0 0
      %445 = vmatprep.subr.bf16.mxu0 0
      %446 = vmatpush1.bf16.msra.mxu0 0
      %447 = vmatprep.subr.bf16.mxu0 0
      %448 = vmatpush1.bf16.msra.mxu0 0
      %449 = vmatprep.subr.bf16.mxu0 0
      %450 = vmatpush1.bf16.msra.mxu0 0
      %451 = vmatprep.subr.bf16.mxu0 0
      %452 = vmatpush1.bf16.msra.mxu0 0
      %453 = vmatprep.mubr.bf16.mxu0 0
      %454 = vmatmul.mubr.bf16.gmra.mrb[0].mxu0 %v349
      %v455 = vpop.f32.mrb[0].mxu0
      %v456 = vadd.f32 %v371, %v455
      %v457 = vpop.f32.mrb[0].mxu0
      %v458 = vpop.f32.mrb[0].mxu0
      %v459 = vadd.f32 %v371, %v458
      %v460 = vpop.f32.mrb[0].mxu0
      %461 = vdwg.mxu0
      %v462 = vmax.f32 %v456, 0.0
      %v463 = vmax.f32 %v459, 0.0
      %v464 = vpack.c.bf16 %v463, %v462
      %v465 = vld [vmem:[%s5] sm:$0xf]
      %v466 = vld [vmem:[%s5 + $0x4] sm:$0xf]
      %v467 = vld [vmem:[%s5 + $0x8] sm:$0xf]
      %v468 = vld [vmem:[%s5 + $0xc] sm:$0xf]
      %v469 = vld [vmem:[%s5 + $0x10] sm:$0xf]
      %v470 = vld [vmem:[%s5 + $0x14] sm:$0xf]
      %v471 = vld [vmem:[%s5 + $0x18] sm:$0xf]
      %v472 = vld [vmem:[%s5 + $0x1c] sm:$0xf]
      %v473 = vld [vmem:[%s5 + $0x20] sm:$0xf]
      %v474 = vld [vmem:[%s5 + $0x24] sm:$0xf]
      %v475 = vld [vmem:[%s5 + $0x28] sm:$0xf]
      %v476 = vld [vmem:[%s5 + $0x2c] sm:$0xf]
      %v477 = vld [vmem:[%s5 + $0x30] sm:$0xf]
      %v478 = vld [vmem:[%s5 + $0x34] sm:$0xf]
      %v479 = vld [vmem:[%s5 + $0x38] sm:$0xf]
      %v480 = vld [vmem:[%s5 + $0x3c] sm:$0xf]
      %v481 = vld [vmem:[%s6] sm:$0x1]
      %v483 = vlaneseq
      %v484 = vshrl.u32 %v483, 7
      %v485 = vsub.s32 0, %v484
      %v486 = vrot.slane %v481, %v485
      %v504 = vunpack.c.l.b16 %v465
      %v505 = vunpack.c.l.b16 %v466
      %v506 = vunpack.c.l.b16 %v467
      %v507 = vunpack.c.l.b16 %v468
      %v508 = vunpack.c.l.b16 %v469
      %v509 = vunpack.c.l.b16 %v470
      %v510 = vunpack.c.l.b16 %v471
      %v511 = vunpack.c.l.b16 %v472
      %v512 = vunpack.c.l.b16 %v473
      %v513 = vunpack.c.l.b16 %v474
      %v514 = vunpack.c.l.b16 %v475
      %v515 = vunpack.c.l.b16 %v476
      %v516 = vunpack.c.l.b16 %v477
      %v517 = vunpack.c.l.b16 %v478
      %v518 = vunpack.c.l.b16 %v479
      %v519 = vunpack.c.l.b16 %v480
      %v520 = vpack.c.b16 %v505, %v504
      %v521 = vpack.c.b16 %v507, %v506
      %v522 = vpack.c.b16 %v509, %v508
      %v523 = vpack.c.b16 %v511, %v510
      %v524 = vpack.c.b16 %v513, %v512
      %v525 = vpack.c.b16 %v515, %v514
      %v526 = vpack.c.b16 %v517, %v516
      %v527 = vpack.c.b16 %v519, %v518
      %536 = vmatprep.subr.bf16.mxu0 0
      %537 = vmatpush1.bf16.msra.mxu0 %v520
      %538 = vmatprep.subr.bf16.mxu0 0
      %539 = vmatpush1.bf16.msra.mxu0 %v521
      %540 = vmatprep.subr.bf16.mxu0 0
      %541 = vmatpush1.bf16.msra.mxu0 %v522
      %542 = vmatprep.subr.bf16.mxu0 0
      %543 = vmatpush1.bf16.msra.mxu0 %v523
      %544 = vmatprep.subr.bf16.mxu0 0
      %545 = vmatpush1.bf16.msra.mxu0 %v524
      %546 = vmatprep.subr.bf16.mxu0 0
      %547 = vmatpush1.bf16.msra.mxu0 %v525
      %548 = vmatprep.subr.bf16.mxu0 0
      %549 = vmatpush1.bf16.msra.mxu0 %v526
      %550 = vmatprep.subr.bf16.mxu0 0
      %551 = vmatpush1.bf16.msra.mxu0 %v527
      %552 = vmatprep.subr.bf16.mxu0 0
      %553 = vmatpush1.bf16.msra.mxu0 0
      %554 = vmatprep.subr.bf16.mxu0 0
      %555 = vmatpush1.bf16.msra.mxu0 0
      %556 = vmatprep.subr.bf16.mxu0 0
      %557 = vmatpush1.bf16.msra.mxu0 0
      %558 = vmatprep.subr.bf16.mxu0 0
      %559 = vmatpush1.bf16.msra.mxu0 0
      %560 = vmatprep.subr.bf16.mxu0 0
      %561 = vmatpush1.bf16.msra.mxu0 0
      %562 = vmatprep.subr.bf16.mxu0 0
      %563 = vmatpush1.bf16.msra.mxu0 0
      %564 = vmatprep.subr.bf16.mxu0 0
      %565 = vmatpush1.bf16.msra.mxu0 0
      %566 = vmatprep.subr.bf16.mxu0 0
      %567 = vmatpush1.bf16.msra.mxu0 0
      %568 = vmatprep.mubr.bf16.mxu0 0
      %569 = vmatmul.mubr.bf16.gmra.mrb[0].mxu0 %v464
      %v570 = vpop.f32.mrb[0].mxu0
      %v571 = vadd.f32 %v486, %v570
      %v572 = vpop.f32.mrb[0].mxu0
      %v573 = vpop.f32.mrb[0].mxu0
      %v574 = vadd.f32 %v486, %v573
      %v575 = vpop.f32.mrb[0].mxu0
      %576 = vdwg.mxu0
      %vm577 = vcmask 64512
      %v578 = vsel %vm577, %v571, -inf
      %579 = vmax.xlane.f32.xlu0 %v578
      %v580 = vpop.xlane.xlu0 %579
      %v581 = vsel %vm577, %v574, -inf
      %582 = vmax.xlane.f32.xlu0 %v581
      %v583 = vpop.xlane.xlu0 %582
      %v584 = vsub.f32 %v571, %v580
      %v585 = vsub.f32 %v574, %v583
      %v586 = vmul.f32 %v584, 1.442695
      %v587 = vpow.pop %v586
      %v588 = vmul.f32 %v585, 1.442695
      %v589 = vpow.pop %v588
      %v590 = vsel %vm577, %v587, 0.0
      %591 = vadd.xlane.f32.xlu0 %v590
      %v592 = vpop.xlane.xlu0 %591
      %v593 = vsel %vm577, %v589, 0.0
      %594 = vadd.xlane.f32.xlu0 %v593
      %v595 = vpop.xlane.xlu0 %594
      %v596 = vlog2.pop %v592
      %v597 = vmul.f32 %v596, 0.6931472
      %v598 = vlog2.pop %v595
      %v599 = vmul.f32 %v598, 0.6931472
      %v600 = vsub.f32 %v584, %v597
      %v601 = vsub.f32 %v585, %v599
      %602 = vst.msk [vmem:[%s280] sm:$0xff] %vm577, %v600
      %603 = vst.msk [vmem:[%s280 + $0x8] sm:$0xff] %vm577, %v601
      %s604 = smul.u32 2, %s18
      %p605 = scmp.lt.s32.totalorder %s604, 7
      %s606 = scalar_select %p605, %s604, 7
      %s607 = smul.addr %s606, 8
      %s608 = scalar_lea.vmem %s7, %s607
      // Predicated region
      $region49: #{tpu_custom_call.1} parent=47 // pred_check
        %p609 = pneg %p188
      $region50: #{tpu_custom_call.1} parent=47 // pred_check_branch
        %611 = sbr.rel (%p609) target = $region52
      $region51: #{tpu_custom_call.1} parent=47 // pred_region
        %s612 = smul.u32 2, %s18
      $region52: #{tpu_custom_call.1} parent=47 // pred_fallthru
        _
    $region48: #{tpu_custom_call.1} parent=5 // pred_fallthru
      _
    %p613 = scmp.le.s32.totalorder 2, %s13
    // Predicated region
    $region53: #{tpu_custom_call.1} parent=5 // pred_check
      %p614 = pneg %p613
    $region54: #{tpu_custom_call.1} parent=5 // pred_check_branch
      %616 = sbr.rel (%p614) target = $region56
    $region55: #{tpu_custom_call.1} parent=5 // pred_region
      %s617 = ssub.s32 %s13, 2
      // Predicated region
      $region57: #{tpu_custom_call.1} parent=55 // pred_check
        %p618 = pneg %p194
      $region58: #{tpu_custom_call.1} parent=55 // pred_check_branch
        %620 = sbr.rel (%p618) target = $region60
      $region59: #{tpu_custom_call.1} parent=55 // pred_region
        %s621 = smul.u32 2, %s19
        %p622 = scmp.lt.s32.totalorder %s621, 7
        %s623 = scalar_select %p622, %s621, 7
        %s624 = smul.addr %s623, 8
        %s625 = scalar_lea.vmem %s7, %s624
      $region60: #{tpu_custom_call.1} parent=55 // pred_fallthru
        _
    $region56: #{tpu_custom_call.1} parent=5 // pred_fallthru
      _
  $region6: #{tpu_custom_call.1} parent=0 // loop_footer
    %s17 = sadd.s32 1, %s13
  $region7: #{tpu_custom_call.1} parent=0 // loop_footer_branch
    %12 = sbr.rel target = $region3
  $region8: #{tpu_custom_call.1} parent=0 // loop_exit
    _

</llo_original>
